<compile_context>
chip_gen: v7x
topology: tpu7x:2x2x1
jax: 0.10.0
libtpu: 0.0.40
codegen_flags: <defaults>
</compile_context>

<pallas_src>
import jax
import jax.numpy as jnp
from jax.experimental import pallas as pl
from jax.experimental.pallas import tpu as pltpu


def _normalize_kernel(img_ref, scale_ref, bias_ref, out_ref):
    # Single fused VPU expression: one load, one multiply-add, one lane-dense
    # store per vreg.  scale/bias are (TM, 1) and broadcast along lanes.
    out_ref[...] = img_ref[...] * scale_ref[...] + bias_ref[...]


def _pick_tiles(rows, cols, target_bytes=2 * 1024 * 1024):
    """Pick (TM, TN) respecting the (8, 128) layout rule, ~target_bytes/tile."""
    # Lane (last) dim: multiple of 128, or the full extent (always legal).
    if cols % 128 == 0:
        tn = min(cols, 2048)
    else:
        tn = cols
    # Sublane (second-to-last) dim: multiple of 8, or the full extent.
    if rows % 8 == 0:
        tm = max(8, (target_bytes // (tn * 4)) // 8 * 8)
        tm = min(rows, tm)
    else:
        tm = rows
    return tm, tn


def normalize(image, mean, std):
    """image: (N, C, H, W) float32; mean/std: (C,) float32.

    Computes (image - mean[c]) / std[c] as image * (1/std) + (-mean/std).
    (<= ~1 ULP deviation vs a true divide; the kernel is HBM-bound either way.)
    """
    N, C, H, W = image.shape
    mean = jnp.asarray(mean, dtype=jnp.float32).reshape(C)
    std = jnp.asarray(std, dtype=jnp.float32).reshape(C)

    rows, cols = N * C, H * W
    # Free view: NCHW is contiguous, so (N*C, H*W) is a pure reshape.
    img2d = image.reshape(rows, cols).astype(jnp.float32)

    # Per-row (= per (n, c)) scale/bias, fed as lane-broadcast (TM, 1) blocks.
    scale_c = 1.0 / std
    bias_c = -mean * scale_c
    scale = jnp.tile(scale_c, N).reshape(rows, 1)
    bias = jnp.tile(bias_c, N).reshape(rows, 1)

    tm, tn = _pick_tiles(rows, cols)
    grid = (pl.cdiv(rows, tm), pl.cdiv(cols, tn))

    out2d = pl.pallas_call(
        _normalize_kernel,
        out_shape=jax.ShapeDtypeStruct((rows, cols), jnp.float32),
        grid_spec=pltpu.PrefetchScalarGridSpec(
            num_scalar_prefetch=0,
            grid=grid,
            in_specs=[
                pl.BlockSpec((tm, tn), lambda i, j: (i, j)),   # image tile
                pl.BlockSpec((tm, 1), lambda i, j: (i, 0)),    # per-row scale
                pl.BlockSpec((tm, 1), lambda i, j: (i, 0)),    # per-row bias
            ],
            out_specs=pl.BlockSpec((tm, tn), lambda i, j: (i, j)),
        ),
        compiler_params=pltpu.CompilerParams(
            dimension_semantics=("parallel", "parallel"),
        ),
    )(img2d, scale, bias)

    return out2d.reshape(N, C, H, W)


class Normalize:
    """JAX/Pallas equivalent of the PyTorch Normalize module (NCHW)."""

    def __init__(self, mean, std):
        self.mean = jnp.asarray(mean, dtype=jnp.float32)
        self.std = jnp.asarray(std, dtype=jnp.float32)

    def __call__(self, batch):
        batch["image"] = normalize(batch["image"], self.mean, self.std)
        return batch


if __name__ == "__main__":
    key = jax.random.PRNGKey(0)
    N, C, H, W = 2, 4, 16, 16
    image = jax.random.uniform(key, (N, C, H, W), dtype=jnp.float32) * 255.0

    # Deterministic per-channel parameters (synthetic, no checkpoint).
    mean = [123.675, 116.28, 103.53, 110.0][:C]
    std = [58.395, 57.12, 57.375, 60.0][:C]

    norm = Normalize(mean, std)
    batch = {"image": image}
    out = norm(batch)["image"]
    jax.block_until_ready(out)

    # Reference check in plain JAX (same broadcasting as PyTorch (1,C,1,1)).
    # Tolerance covers the ~1-ULP difference from the scale/bias FMA form.
    mean_b = jnp.asarray(mean, dtype=jnp.float32).reshape(1, C, 1, 1)
    std_b = jnp.asarray(std, dtype=jnp.float32).reshape(1, C, 1, 1)
    ref = (image - mean_b) / std_b
    assert out.shape == (N, C, H, W)
    assert jnp.allclose(out, ref, rtol=1e-5, atol=1e-5)

    print("KERNEL_OK")
</pallas_src>

<mosaic_0001>
module attributes {stable_mosaic.version = 11 : i64} {
  func.func @_normalize_kernel(%arg0: i32, %arg1: i32, %arg2: memref<8x256xf32, #tpu.memory_space<vmem>>, %arg3: memref<8x1xf32, #tpu.memory_space<vmem>>, %arg4: memref<8x1xf32, #tpu.memory_space<vmem>>, %arg5: memref<8x256xf32, #tpu.memory_space<vmem>>) attributes {dimension_semantics = [#tpu.dimension_semantics<parallel>, #tpu.dimension_semantics<parallel>], iteration_bounds = array<i64: 1, 1>, scalar_prefetch = 0 : i64, scratch_operands = 0 : i64, tpu.core_type = #tpu.core_type<tc>, window_params = [{transform_indices = @transform_0, window_bounds = array<i64: 8, 256>}, {transform_indices = @transform_1, window_bounds = array<i64: 8, 1>}, {transform_indices = @transform_2, window_bounds = array<i64: 8, 1>}, {transform_indices = @transform_3, window_bounds = array<i64: 8, 256>}]} {
    %c0 = arith.constant 0 : index
    %c0_0 = arith.constant 0 : index
    %0 = vector.load %arg2[%c0, %c0_0] : memref<8x256xf32, #tpu.memory_space<vmem>>, vector<8x256xf32>
    %c0_1 = arith.constant 0 : index
    %c0_2 = arith.constant 0 : index
    %1 = vector.load %arg3[%c0_1, %c0_2] : memref<8x1xf32, #tpu.memory_space<vmem>>, vector<8x1xf32>
    %2 = vector.broadcast %1 : vector<8x1xf32> to vector<8x256xf32>
    %3 = arith.mulf %0, %2 : vector<8x256xf32>
    %c0_3 = arith.constant 0 : index
    %c0_4 = arith.constant 0 : index
    %4 = vector.load %arg4[%c0_3, %c0_4] : memref<8x1xf32, #tpu.memory_space<vmem>>, vector<8x1xf32>
    %5 = vector.broadcast %4 : vector<8x1xf32> to vector<8x256xf32>
    %6 = arith.addf %3, %5 : vector<8x256xf32>
    %c0_5 = arith.constant 0 : index
    %c0_6 = arith.constant 0 : index
    %7 = vector.load %arg5[%c0_5, %c0_6] : memref<8x256xf32, #tpu.memory_space<vmem>>, vector<8x256xf32>
    tpu.vector_store %arg5[%c0_5, %c0_6], %6 {strides = array<i32>} : memref<8x256xf32, #tpu.memory_space<vmem>>, vector<8x256xf32>,
    return
  }
  func.func @transform_0(%arg0: i32, %arg1: i32) -> (i32, i32) {
    %c0_i32 = arith.constant 0 : i32
    return %arg0, %arg1 : i32, i32
  }
  func.func @transform_1(%arg0: i32, %arg1: i32) -> (i32, i32) {
    %c0_i32 = arith.constant 0 : i32
    %c0_i32_0 = arith.constant 0 : i32
    return %arg0, %c0_i32 : i32, i32
  }
  func.func @transform_2(%arg0: i32, %arg1: i32) -> (i32, i32) {
    %c0_i32 = arith.constant 0 : i32
    %c0_i32_0 = arith.constant 0 : i32
    return %arg0, %c0_i32 : i32, i32
  }
  func.func @transform_3(%arg0: i32, %arg1: i32) -> (i32, i32) {
    %c0_i32 = arith.constant 0 : i32
    return %arg0, %arg1 : i32, i32
  }
}

</mosaic_0001>

<llo_original>
// kernel: tpu_custom_call.1
$region0: #{tpu_custom_call.1}
  #allocation0 [shape = 'u32[]', space=smem, size = 0x4, offset = 0x4, fixed_abs, tag = 'smem constant byte address 0x4 - core index']
  #allocation1 [shape = 'u32[144,128]{1,0:T(1,128)}', space=vmem, size = 0x12000, scoped, tag = 'internal scratch']
  %s0 = inlined_call_operand.vmem [shape: f32[8,256], index: 0, kind: input, shape index: {}]
  %s1 = inlined_call_operand.vmem [shape: f32[8,1], index: 1, kind: input, shape index: {}]
  %s2 = inlined_call_operand.vmem [shape: f32[8,1], index: 2, kind: input, shape index: {}]
  %s3 = inlined_call_operand.hbm [shape: f32[8,256], index: 3, kind: output, shape index: {}]
  %s4 = sld [smem:[#allocation0]]
  $region22: #{tpu_custom_call.1} parent=0
    _
  %s6 = ssub.s32 1, %s4
  %s7 = scalar_select 0, %s6, %s4
  $region1: #{tpu_custom_call.1} parent=0
    #allocation2 [shape = 'u8[8192]{0}', space=vmem, size = 0x2000, scoped, tag = 'output window, operand 0, single buffered']
    #allocation3 [shape = 's32[1]{0}', space=sflag, size = 0x4, scoped, tag = 'scoped memory for tpu_custom_call.1']
    %8 = vsyncpa [#allocation3], 0
    // Predicated region
    $region2: #{tpu_custom_call.1} parent=1 // pred_check
      _
    $region3: #{tpu_custom_call.1} parent=1 // pred_check_branch
      %10 = sbr.rel (0) target = $region5
    $region4: #{tpu_custom_call.1} parent=1 // pred_region
      _
    $region5: #{tpu_custom_call.1} parent=1 // pred_fallthru
      _
    // Predicated region
    $region6: #{tpu_custom_call.1} parent=1 // pred_check
      _
    $region7: #{tpu_custom_call.1} parent=1 // pred_check_branch
      %12 = sbr.rel (0) target = $region9
    $region8: #{tpu_custom_call.1} parent=1 // pred_region
      _
    $region9: #{tpu_custom_call.1} parent=1 // pred_fallthru
      _
    // Predicated region
    $region10: #{tpu_custom_call.1} parent=1 // pred_check
      _
    $region11: #{tpu_custom_call.1} parent=1 // pred_check_branch
      %14 = sbr.rel (0) target = $region13
    $region12: #{tpu_custom_call.1} parent=1 // pred_region
      _
    $region13: #{tpu_custom_call.1} parent=1 // pred_fallthru
      _
    %v15 = vld [vmem:[%s0] sm:$0xff]
    %v16 = vld [vmem:[%s0 + $0x8] sm:$0xff]
    %v17 = vld [vmem:[%s1] sm:$0xff]
    %19 = vset.pattern.permute.xlu0 0
    %20 = vperm.xlu0 %19, %v17
    %v21 = vpop.permute.xlu0 %20
    %v23 = vmul.f32 %v15, %v21
    %v24 = vmul.f32 %v16, %v21
    %v25 = vld [vmem:[%s2] sm:$0xff]
    %27 = vset.pattern.permute.xlu0 0
    %28 = vperm.xlu0 %27, %v25
    %v29 = vpop.permute.xlu0 %28
    %v31 = vadd.f32 %v23, %v29
    %v32 = vadd.f32 %v24, %v29
    %33 = vst [vmem:[#allocation2] sm:$0xff] %v31
    %34 = vst [vmem:[#allocation2 + $0x8] sm:$0xff] %v32
    // Predicated region
    $region14: #{tpu_custom_call.1} parent=1 // pred_check
      _
    $region15: #{tpu_custom_call.1} parent=1 // pred_check_branch
      %36 = sbr.rel (0) target = $region17
    $region16: #{tpu_custom_call.1} parent=1 // pred_region
      %s38 = ssub.s32 256, 256
      %39 = vsyncadd [#allocation3], %s38
      %s41 = sshll.u32 [#allocation2], 4
      %s42 = int_to_ptr.vmem [resolvable:$true] %s41
      %44 = dma.vmem_to_hbm [thread:$0]  %s42, 256, %s3, [#allocation3]
    $region17: #{tpu_custom_call.1} parent=1 // pred_fallthru
      _
    // Predicated region
    $region18: #{tpu_custom_call.1} parent=1 // pred_check
      _
    $region19: #{tpu_custom_call.1} parent=1 // pred_check_branch
      %46 = sbr.rel (0) target = $region21
    $region20: #{tpu_custom_call.1} parent=1 // pred_region
      %47 = dma.done [#allocation3], 256
    $region21: #{tpu_custom_call.1} parent=1 // pred_fallthru
      _
    %48 = vsyncpa [#allocation3], 1

</llo_original>
